<compile_context>
chip_gen: v5e
topology: v5e:2x2
jax: 0.10.0
libtpu: 0.0.40
codegen_flags: <defaults>
</compile_context>

<pallas_src>
import functools

import numpy as np
import jax
import jax.numpy as jnp
from jax import lax
from jax.experimental import pallas as pl
from jax.experimental.pallas import tpu as pltpu


_MIB = 1024 * 1024


def _vmem_capacity_bytes():
    try:
        cap = int(pltpu.get_tpu_info().vmem_capacity_bytes)
        if cap > 0:
            return cap
    except Exception:
        pass
    return 64 * _MIB  # conservative default (v7x per-TC VMEM)


@functools.lru_cache(maxsize=None)
def _tuning():
    """Generation-aware block / budget sizing.

    v7x-like (<=64 MiB VMEM, ~3.2 TB/s HBM): bigger blocks to hide the
    ~0.35 us per-grid-step cost.  v5e/v6e (128 MiB VMEM, slower HBM): 2 MiB
    blocks already saturate HBM, keep VMEM use modest.
    """
    cap = _vmem_capacity_bytes()
    if cap <= 64 * _MIB:              # v7x-like
        target_block = 4 * _MIB
        budget = (cap * 3) // 8       # ~24 MiB
    else:                             # v5e / v6e
        target_block = 2 * _MIB
        budget = 48 * _MIB
    slab_budget = min(budget // 5, 8 * _MIB)
    return target_block, budget, slab_budget


def _vmem_limit(needed_bytes, budget):
    del budget
    return int(max(32 * _MIB, needed_bytes + 8 * _MIB))


def _cost(nbytes):
    # Pure 2x-bytes memory op: no flops, no transcendentals.
    return pl.CostEstimate(flops=0, transcendentals=0, bytes_accessed=int(nbytes))


# ---------------------------------------------------------------------------
# Kernels
# ---------------------------------------------------------------------------

def _copy_kernel(perm_ref, x_ref, o_ref):
    # Gather happens at the DMA level: the input BlockSpec's index_map is
    # driven by the scalar-prefetched permutation (row perm[i] -> row i).
    # The body is a straight dense tile copy.
    del perm_ref
    o_ref[...] = x_ref[...]


def _slab_gather_kernel(perm_ref, x_ref, o_ref):
    # Whole (C, R, lane) slab is VMEM-resident; permute the C rows in VMEM.
    C = o_ref.shape[1]

    def copy_row(dst, src):
        o_ref[0, pl.ds(dst, 1), :, :] = x_ref[0, pl.ds(src, 1), :, :]

    if C <= 64:
        # Short fixed trip count: fully unrolled static loop.
        for i in range(C):
            copy_row(i, perm_ref[i])
    else:
        def body(i, carry):
            copy_row(i, perm_ref[i])
            return carry
        lax.fori_loop(0, C, body, 0)


# ---------------------------------------------------------------------------
# Paths
# ---------------------------------------------------------------------------

def _dense_path(x3, perm, *, target_block, budget):
    """DMA-level gather of dense (S, 128) slabs; requires M % 128 == 0."""
    B_pre, C, M = x3.shape
    itemsize = int(jnp.dtype(x3.dtype).itemsize)
    lane = 128
    R = M // lane
    sub_mult = max(32 // itemsize, 8)            # 8 f32, 16 bf16, 32 int8/fp8
    max_sub = max(target_block // (lane * itemsize), sub_mult)
    if R <= max_sub:
        S = R                                    # full extent: always legal
    else:
        S = max(sub_mult, (int(max_sub) // sub_mult) * sub_mult)

    xv = x3.reshape(B_pre, C, R, lane)           # pure view
    grid = (B_pre * C, pl.cdiv(R, S))            # fused leading parallel axis
    block = (1, 1, S, lane)

    def in_map(i, j, p):
        return (i // C, p[i % C], j, 0)

    def out_map(i, j, p):
        return (i // C, i % C, j, 0)

    block_bytes = S * lane * itemsize
    out = pl.pallas_call(
        _copy_kernel,
        out_shape=jax.ShapeDtypeStruct((B_pre, C, R, lane), x3.dtype),
        grid_spec=pltpu.PrefetchScalarGridSpec(
            num_scalar_prefetch=1,               # permutation lives in SMEM
            grid=grid,
            in_specs=[pl.BlockSpec(block, in_map,
                                   pipeline_mode=pl.Buffered(3))],
            out_specs=pl.BlockSpec(block, out_map),
        ),
        compiler_params=pltpu.CompilerParams(
            dimension_semantics=("parallel", "parallel"),
            vmem_limit_bytes=_vmem_limit((3 + 2) * block_bytes, budget),
        ),
        cost_estimate=_cost(2 * B_pre * C * M * itemsize),
    )(perm, xv)
    return out.reshape(B_pre, C, M)


def _slab_path(x3, perm, *, budget):
    """Whole-(C, M) slab per prefix; rows permuted inside VMEM."""
    B_pre, C, M = x3.shape
    itemsize = int(jnp.dtype(x3.dtype).itemsize)
    if M >= 128 and M % 128 == 0:
        lane, R = 128, M // 128                  # dense (R,128) row tiles
    else:
        lane, R = M, 1
    xv = x3.reshape(B_pre, C, R, lane)           # pure view
    block = (1, C, R, lane)
    slab_bytes = C * M * itemsize

    out = pl.pallas_call(
        _slab_gather_kernel,
        out_shape=jax.ShapeDtypeStruct((B_pre, C, R, lane), x3.dtype),
        grid_spec=pltpu.PrefetchScalarGridSpec(
            num_scalar_prefetch=1,
            grid=(B_pre,),
            in_specs=[pl.BlockSpec(block, lambda b, p: (b, 0, 0, 0))],
            out_specs=pl.BlockSpec(block, lambda b, p: (b, 0, 0, 0)),
        ),
        compiler_params=pltpu.CompilerParams(
            dimension_semantics=("parallel",),
            vmem_limit_bytes=_vmem_limit(4 * slab_bytes, budget),
        ),
        cost_estimate=_cost(2 * B_pre * C * M * itemsize),
    )(perm, xv)
    return out.reshape(B_pre, C, M)


def _rowdma_fallback(x3, perm, *, budget):
    """Last resort: tiny rows (M < 128) whose (C, M) slab is too big for VMEM.

    Correct but issues one small DMA + one grid step per gathered row.
    TODO(synk): replace with a manual HBM->HBM multi-row DMA ring.
    """
    B_pre, C, M = x3.shape
    itemsize = int(jnp.dtype(x3.dtype).itemsize)
    block = (1, 1, M)                            # M is the full extent here

    def in_map(i, p):
        return (i // C, p[i % C], 0)

    def out_map(i, p):
        return (i // C, i % C, 0)

    out = pl.pallas_call(
        _copy_kernel,
        out_shape=jax.ShapeDtypeStruct((B_pre, C, M), x3.dtype),
        grid_spec=pltpu.PrefetchScalarGridSpec(
            num_scalar_prefetch=1,
            grid=(B_pre * C,),
            in_specs=[pl.BlockSpec(block, in_map,
                                   pipeline_mode=pl.Buffered(3))],
            out_specs=pl.BlockSpec(block, out_map),
        ),
        compiler_params=pltpu.CompilerParams(
            dimension_semantics=("parallel",),
            vmem_limit_bytes=_vmem_limit(5 * M * itemsize, budget),
        ),
        cost_estimate=_cost(2 * B_pre * C * M * itemsize),
    )(perm, x3)
    return out


def _permute3(x3, perm, target_block, budget, slab_budget):
    """Dispatch on (B_pre, C, M) contiguous view."""
    B_pre, C, M = x3.shape
    itemsize = int(jnp.dtype(x3.dtype).itemsize)
    if C * M * itemsize <= slab_budget:
        # Fewest grid steps / DMAs; in-VMEM gather over dense row tiles.
        return _slab_path(x3, perm, budget=budget)
    if M >= 128 and M % 128 == 0:
        return _dense_path(x3, perm, target_block=target_block, budget=budget)
    if M >= 128:
        # Unaligned wide rows that don't fit a VMEM slab: 128-aligned prefix
        # through the dense gather path, <128-element tail separately.
        M_a = (M // 128) * 128
        y_main = _dense_path(x3[:, :, :M_a], perm,
                             target_block=target_block, budget=budget)
        y_tail = _permute3(x3[:, :, M_a:], perm, target_block, budget, slab_budget)
        return jnp.concatenate([y_main, y_tail], axis=-1)
    return _rowdma_fallback(x3, perm, budget=budget)


def _permute_pallas(x, permutation, dim):
    """index_select(x, dim, permutation) as a Pallas TPU gather."""
    if dim >= x.ndim:
        raise ValueError(f"No dimension {dim} in inputs.")
    C = x.shape[dim]
    if C != permutation.shape[0]:
        raise ValueError(
            f"Dimension {dim} in inputs must be of size {permutation.shape[0]}.")

    shape = x.shape
    B_pre = int(np.prod(shape[:dim], dtype=np.int64))   # prod of leading dims
    M = int(np.prod(shape[dim + 1:], dtype=np.int64))   # prod of trailing dims

    target_block, budget, slab_budget = _tuning()
    x3 = x.reshape(B_pre, C, M)                          # pure view
    out3 = _permute3(x3, permutation.astype(jnp.int32),
                     target_block, budget, slab_budget)
    return out3.reshape(shape)


# ---------------------------------------------------------------------------
# Module
# ---------------------------------------------------------------------------

class Permutation:
    """JAX/Pallas port of the PyTorch Permutation flow layer."""

    def __init__(self, permutation, dim=1):
        perm_np = np.asarray(permutation)
        if perm_np.ndim != 1:
            raise ValueError("Permutation must be a 1D tensor.")
        if not (isinstance(dim, (int, np.integer)) and dim > 0):
            raise ValueError("dim must be a positive integer.")
        perm_np = perm_np.astype(np.int32)
        n = perm_np.shape[0]
        # Validate a true permutation (out-of-range indices would drive the
        # data-dependent index_map out of bounds -> silent garbage on TPU).
        if not np.array_equal(np.sort(perm_np), np.arange(n, dtype=np.int32)):
            raise ValueError("permutation must contain each index in [0, n) exactly once.")
        self._dim = int(dim)
        self._permutation = jnp.asarray(perm_np)
        # Precompute & cache the inverse (static argsort).
        self._inverse = jnp.asarray(np.argsort(perm_np).astype(np.int32))

    @property
    def _inverse_permutation(self):
        return self._inverse

    def forward(self, x, logpx=None, reverse=False, context=None):
        perm = self._inverse if reverse else self._permutation
        y = _permute_pallas(x, perm, self._dim)
        # (PyTorch module computes logabsdet = zeros(batch) but discards it;
        #  logpx is returned unchanged.)
        if logpx is None:
            return y
        return (y, logpx)

    __call__ = forward


# ---------------------------------------------------------------------------
# Self-test
# ---------------------------------------------------------------------------

if __name__ == "__main__":
    key = jax.random.PRNGKey(0)
    k_x, k_p = jax.random.split(key)
    target_block, budget, slab_budget = _tuning()

    # Main case: channel permutation of an image tensor (slab path, dense
    # (R,128) row tiles since H*W = 256 is 128-aligned).
    B, C, H, W = 2, 4, 16, 16
    x = jax.random.normal(k_x, (B, C, H, W), dtype=jnp.float32)
    perm = jax.random.permutation(k_p, C).astype(jnp.int32)
    logpx = jnp.zeros((B,), dtype=jnp.float32)

    layer = Permutation(perm, dim=1)
    y = jax.block_until_ready(layer(x))                     # forward
    y2, lp = layer(x, logpx=logpx)                          # forward + logpx
    jax.block_until_ready(y2)
    x_rec = jax.block_until_ready(layer(y, reverse=True))   # reverse (cached inverse)

    y_ref = jnp.take(x, perm, axis=1)
    assert jnp.array_equal(y, y_ref), "forward permutation mismatch"
    assert jnp.array_equal(y2, y_ref), "forward-with-logpx permutation mismatch"
    assert jnp.array_equal(lp, logpx), "logpx must pass through unchanged"
    assert jnp.array_equal(x_rec, x), "reverse permutation must invert forward"

    # Packed dtype (bf16) on the slab path with full-sublane-tile rows.
    xb = jax.random.normal(k_x, (2, 4, 16, 128), dtype=jnp.float32).astype(jnp.bfloat16)
    yb = jax.block_until_ready(layer(xb))
    assert jnp.array_equal(yb, jnp.take(xb, perm, axis=1)), "bf16 slab path mismatch"

    # Small unaligned rows on a non-default dim (slab path, (1, M) row tiles).
    x5 = jax.random.normal(k_x, (2, 3, 5, 20), dtype=jnp.float32)
    perm5 = jnp.asarray([2, 0, 4, 1, 3], dtype=jnp.int32)
    layer5 = Permutation(perm5, dim=2)
    y5 = jax.block_until_ready(layer5(x5))
    assert jnp.array_equal(y5, jnp.take(x5, perm5, axis=2)), "dim=2 slab path mismatch"
    x5_rec = jax.block_until_ready(layer5(y5, reverse=True))
    assert jnp.array_equal(x5_rec, x5), "dim=2 reverse mismatch"

    # Exercise the dense DMA-gather path directly (Buffered(3) input, fused
    # (B_pre*C) parallel axis) at a small shape.
    yd = jax.block_until_ready(
        _dense_path(x.reshape(B, C, H * W), perm,
                    target_block=target_block, budget=budget))
    assert jnp.array_equal(yd.reshape(B, C, H, W), y_ref), "dense path mismatch"

    # Exercise the split (aligned prefix + tail) and the last-resort fallback
    # by forcing slab_budget=0 on an unaligned-M input.
    x130 = jax.random.normal(k_x, (2, 4, 130), dtype=jnp.float32)
    ys = jax.block_until_ready(_permute3(x130, perm, target_block, budget, 0))
    assert jnp.array_equal(ys, jnp.take(x130, perm, axis=1)), "split/fallback path mismatch"

    print("KERNEL_OK")
</pallas_src>

<mosaic_0001>
module attributes {stable_mosaic.version = 11 : i64} {
  func.func @_slab_gather_kernel(%arg0: i32, %arg1: memref<4xi32, #tpu.memory_space<smem>>, %arg2: memref<1x4x2x128xf32, #tpu.memory_space<vmem>>, %arg3: memref<1x4x2x128xf32, #tpu.memory_space<vmem>>) attributes {dimension_semantics = [#tpu.dimension_semantics<parallel>], iteration_bounds = array<i64: 2>, scalar_prefetch = 1 : i64, scratch_operands = 0 : i64, tpu.core_type = #tpu.core_type<tc>, window_params = [{transform_indices = @transform_0, window_bounds = array<i64: 1, 4, 2, 128>}, {transform_indices = @transform_1, window_bounds = array<i64: 1, 4, 2, 128>}]} {
    %c0 = arith.constant 0 : index
    %0 = memref.load %arg1[%c0] : memref<4xi32, #tpu.memory_space<smem>>
    %c0_0 = arith.constant 0 : index
    %1 = arith.index_cast %0 : i32 to index
    %c0_1 = arith.constant 0 : index
    %c0_2 = arith.constant 0 : index
    %2 = vector.load %arg2[%c0_0, %1, %c0_1, %c0_2] : memref<1x4x2x128xf32, #tpu.memory_space<vmem>>, vector<1x1x2x128xf32>
    %3 = vector.shape_cast %2 : vector<1x1x2x128xf32> to vector<1x2x128xf32>
    %c0_3 = arith.constant 0 : index
    %c0_4 = arith.constant 0 : index
    %c0_5 = arith.constant 0 : index
    %c0_6 = arith.constant 0 : index
    %4 = vector.load %arg3[%c0_3, %c0_4, %c0_5, %c0_6] : memref<1x4x2x128xf32, #tpu.memory_space<vmem>>, vector<1x1x2x128xf32>
    %5 = vector.shape_cast %4 : vector<1x1x2x128xf32> to vector<1x2x128xf32>
    %6 = vector.shape_cast %3 : vector<1x2x128xf32> to vector<1x1x2x128xf32>
    tpu.vector_store %arg3[%c0_3, %c0_4, %c0_5, %c0_6], %6 {strides = array<i32>} : memref<1x4x2x128xf32, #tpu.memory_space<vmem>>, vector<1x1x2x128xf32>,
    %c1 = arith.constant 1 : index
    %7 = memref.load %arg1[%c1] : memref<4xi32, #tpu.memory_space<smem>>
    %c0_7 = arith.constant 0 : index
    %8 = arith.index_cast %7 : i32 to index
    %c0_8 = arith.constant 0 : index
    %c0_9 = arith.constant 0 : index
    %9 = vector.load %arg2[%c0_7, %8, %c0_8, %c0_9] : memref<1x4x2x128xf32, #tpu.memory_space<vmem>>, vector<1x1x2x128xf32>
    %10 = vector.shape_cast %9 : vector<1x1x2x128xf32> to vector<1x2x128xf32>
    %c0_10 = arith.constant 0 : index
    %c1_11 = arith.constant 1 : index
    %c0_12 = arith.constant 0 : index
    %c0_13 = arith.constant 0 : index
    %11 = vector.load %arg3[%c0_10, %c1_11, %c0_12, %c0_13] : memref<1x4x2x128xf32, #tpu.memory_space<vmem>>, vector<1x1x2x128xf32>
    %12 = vector.shape_cast %11 : vector<1x1x2x128xf32> to vector<1x2x128xf32>
    %13 = vector.shape_cast %10 : vector<1x2x128xf32> to vector<1x1x2x128xf32>
    tpu.vector_store %arg3[%c0_10, %c1_11, %c0_12, %c0_13], %13 {strides = array<i32>} : memref<1x4x2x128xf32, #tpu.memory_space<vmem>>, vector<1x1x2x128xf32>,
    %c2 = arith.constant 2 : index
    %14 = memref.load %arg1[%c2] : memref<4xi32, #tpu.memory_space<smem>>
    %c0_14 = arith.constant 0 : index
    %15 = arith.index_cast %14 : i32 to index
    %c0_15 = arith.constant 0 : index
    %c0_16 = arith.constant 0 : index
    %16 = vector.load %arg2[%c0_14, %15, %c0_15, %c0_16] : memref<1x4x2x128xf32, #tpu.memory_space<vmem>>, vector<1x1x2x128xf32>
    %17 = vector.shape_cast %16 : vector<1x1x2x128xf32> to vector<1x2x128xf32>
    %c0_17 = arith.constant 0 : index
    %c2_18 = arith.constant 2 : index
    %c0_19 = arith.constant 0 : index
    %c0_20 = arith.constant 0 : index
    %18 = vector.load %arg3[%c0_17, %c2_18, %c0_19, %c0_20] : memref<1x4x2x128xf32, #tpu.memory_space<vmem>>, vector<1x1x2x128xf32>
    %19 = vector.shape_cast %18 : vector<1x1x2x128xf32> to vector<1x2x128xf32>
    %20 = vector.shape_cast %17 : vector<1x2x128xf32> to vector<1x1x2x128xf32>
    tpu.vector_store %arg3[%c0_17, %c2_18, %c0_19, %c0_20], %20 {strides = array<i32>} : memref<1x4x2x128xf32, #tpu.memory_space<vmem>>, vector<1x1x2x128xf32>,
    %c3 = arith.constant 3 : index
    %21 = memref.load %arg1[%c3] : memref<4xi32, #tpu.memory_space<smem>>
    %c0_21 = arith.constant 0 : index
    %22 = arith.index_cast %21 : i32 to index
    %c0_22 = arith.constant 0 : index
    %c0_23 = arith.constant 0 : index
    %23 = vector.load %arg2[%c0_21, %22, %c0_22, %c0_23] : memref<1x4x2x128xf32, #tpu.memory_space<vmem>>, vector<1x1x2x128xf32>
    %24 = vector.shape_cast %23 : vector<1x1x2x128xf32> to vector<1x2x128xf32>
    %c0_24 = arith.constant 0 : index
    %c3_25 = arith.constant 3 : index
    %c0_26 = arith.constant 0 : index
    %c0_27 = arith.constant 0 : index
    %25 = vector.load %arg3[%c0_24, %c3_25, %c0_26, %c0_27] : memref<1x4x2x128xf32, #tpu.memory_space<vmem>>, vector<1x1x2x128xf32>
    %26 = vector.shape_cast %25 : vector<1x1x2x128xf32> to vector<1x2x128xf32>
    %27 = vector.shape_cast %24 : vector<1x2x128xf32> to vector<1x1x2x128xf32>
    tpu.vector_store %arg3[%c0_24, %c3_25, %c0_26, %c0_27], %27 {strides = array<i32>} : memref<1x4x2x128xf32, #tpu.memory_space<vmem>>, vector<1x1x2x128xf32>,
    return
  }
  func.func @transform_0(%arg0: i32, %arg1: memref<4xi32, #tpu.memory_space<smem>>) -> (i32, i32, i32, i32) {
    %c0_i32 = arith.constant 0 : i32
    %c0_i32_0 = arith.constant 0 : i32
    %c0_i32_1 = arith.constant 0 : i32
    %c0_i32_2 = arith.constant 0 : i32
    return %arg0, %c0_i32, %c0_i32_0, %c0_i32_1 : i32, i32, i32, i32
  }
  func.func @transform_1(%arg0: i32, %arg1: memref<4xi32, #tpu.memory_space<smem>>) -> (i32, i32, i32, i32) {
    %c0_i32 = arith.constant 0 : i32
    %c0_i32_0 = arith.constant 0 : i32
    %c0_i32_1 = arith.constant 0 : i32
    %c0_i32_2 = arith.constant 0 : i32
    return %arg0, %c0_i32, %c0_i32_0, %c0_i32_1 : i32, i32, i32, i32
  }
}

</mosaic_0001>

<llo_original>
// kernel: tpu_custom_call.1
$region0: #{tpu_custom_call.1}
  #allocation0 [shape = 'u32[]', space=smem, size = 0x4, offset = 0x4, fixed_abs, tag = 'smem constant byte address 0x4 - core index']
  #allocation1 [shape = 'u32[72,128]{1,0:T(1,128)}', space=vmem, size = 0x9000, scoped, tag = 'internal scratch']
  #allocation2 [shape = 's32[1]{0}', space=sflag, size = 0x4, scoped, tag = 'scoped memory for tpu_custom_call.1']
  #allocation3 [shape = 'u8[512]{0}', space=smem, size = 0x200, scoped, tag = 'prefetched SMEM operand 0']
  %s0 = inlined_call_operand.hbm [shape: s32[4], index: 0, kind: input, shape index: {}]
  %s1 = inlined_call_operand.hbm [shape: f32[2,4,2,128], index: 1, kind: input, shape index: {}]
  %s2 = inlined_call_operand.hbm [shape: f32[2,4,2,128], index: 2, kind: output, shape index: {}]
  %s3 = sld [smem:[#allocation0]]
  $region41: #{tpu_custom_call.1} parent=0
    _
  %s5 = ssub.s32 1, %s3
  %s6 = scalar_select 0, %s5, %s3
  %s8 = sshll.u32 %s0, 4
  %s9 = int_to_ptr.hbm [resolvable:$true] %s8
  %11 = dma.hbm_to_smem %s9, 16, [#allocation3], [#allocation2]
  %13 = dma.done [#allocation2], 16
  %14 = sfence
  $region1: #{tpu_custom_call.1} parent=0
    #allocation4 [shape = 'u8[8192]{0}', space=vmem, size = 0x2000, scoped, tag = 'input window, operand 1']
    #allocation5 [shape = 's32[2]{0}', space=sflag, size = 0x8, scoped, tag = 'scoped memory for tpu_custom_call.1']
    #allocation6 [shape = 's32[2]{0}', space=sflag, size = 0x8, scoped, tag = 'scoped memory for tpu_custom_call.1']
    #allocation7 [shape = 'u8[8192]{0}', space=vmem, size = 0x2000, scoped, tag = 'output window, operand 0']
    %15 = vsyncpa [#allocation5], 0
    %s16 = scalar_lea.sflag [#allocation5], 1
    %17 = vsyncpa %s16, 0
    %18 = vsyncpa [#allocation6], 0
    %s19 = scalar_lea.sflag [#allocation6], 1
    %20 = vsyncpa %s19, 0
    loop: start=0, step=1, limit=4
    $region2: #{tpu_custom_call.1} parent=1 // loop_pre_header
      _
    $region3: #{tpu_custom_call.1} parent=1 // loop_header
      %s22 = sphi 0, %s26
      %p23 = scmp.ge.s32.totalorder %s22, 4
      %s32 = sphi 0, %s34
      %s35 = sphi 0, %s32
      %s36 = sphi 0, %s35
      %s52 = sphi 0, %s36
      %s58 = sphi 0, %s60
      %s61 = sphi 0, %s58
      %s62 = sphi 0, %s61
      %s78 = sphi 0, %s62
    $region4: #{tpu_custom_call.1} parent=1 // loop_header_branch
      %25 = sbr.rel (%p23) target = $region8
    $region5: #{tpu_custom_call.1} parent=1 // loop_body
      %s27 = ssub.s32 %s22, 1
      %s28 = ssub.s32 %s22, 2
      %s29 = sadd.s32 %s22, 1
      %s30 = ssub.s32 %s22, %s29
      %p31 = scmp.eq.s32.totalorder %s30, 0
      %s33 = sadd.s32 %s32, 1
      %s34 = scalar_select %p31, %s32, %s33
      %p37 = pneg %p31
      %p38 = scmp.eq.s32.totalorder %s22, 1
      %p39 = por %p37, %p38
      %p40 = scmp.ne.s32.totalorder %s32, %s35
      %p41 = scmp.eq.s32.totalorder %s22, 0
      %p42 = por %p40, %p41
      %p43 = scmp.ne.s32.totalorder %s32, %s35
      %p44 = scmp.eq.s32.totalorder %s27, 1
      %p45 = por %p43, %p44
      %p46 = scmp.ne.s32.totalorder %s35, %s36
      %p47 = scmp.eq.s32.totalorder %s27, 0
      %p48 = por %p46, %p47
      %p49 = scmp.ne.s32.totalorder %s35, %s36
      %p50 = scmp.eq.s32.totalorder %s28, 1
      %p51 = por %p49, %p50
      %p53 = scmp.ne.s32.totalorder %s36, %s52
      %p54 = scmp.eq.s32.totalorder %s28, 0
      %p55 = por %p53, %p54
      %s56 = ssub.s32 %s22, %s29
      %p57 = scmp.eq.s32.totalorder %s56, 0
      %s59 = sadd.s32 %s58, 1
      %s60 = scalar_select %p57, %s58, %s59
      %p63 = pneg %p57
      %p64 = scmp.eq.s32.totalorder %s22, 1
      %p65 = por %p63, %p64
      %p66 = scmp.ne.s32.totalorder %s58, %s61
      %p67 = scmp.eq.s32.totalorder %s22, 0
      %p68 = por %p66, %p67
      %p69 = scmp.ne.s32.totalorder %s58, %s61
      %p70 = scmp.eq.s32.totalorder %s27, 1
      %p71 = por %p69, %p70
      %p72 = scmp.ne.s32.totalorder %s61, %s62
      %p73 = scmp.eq.s32.totalorder %s27, 0
      %p74 = por %p72, %p73
      %p75 = scmp.ne.s32.totalorder %s61, %s62
      %p76 = scmp.eq.s32.totalorder %s28, 1
      %p77 = por %p75, %p76
      %p79 = scmp.ne.s32.totalorder %s62, %s78
      %p80 = scmp.eq.s32.totalorder %s28, 0
      %p81 = por %p79, %p80
      %p82 = scmp.le.s32.totalorder 1, %s22
      %p83 = scmp.lt.s32.totalorder %s22, 3
      %p84 = pnand %p82, %p83
      %p85 = pneg %p84
      // Predicated region
      $region9: #{tpu_custom_call.1} parent=5 // pred_check
        _
      $region10: #{tpu_custom_call.1} parent=5 // pred_check_branch
        %87 = sbr.rel (%p84) target = $region12
      $region11: #{tpu_custom_call.1} parent=5 // pred_region
        %s88 = ssub.s32 %s22, 1
      $region12: #{tpu_custom_call.1} parent=5 // pred_fallthru
        _
      %p89 = scmp.lt.s32.totalorder %s22, 2
      // Predicated region
      $region13: #{tpu_custom_call.1} parent=5 // pred_check
        %p90 = pneg %p89
      $region14: #{tpu_custom_call.1} parent=5 // pred_check_branch
        %92 = sbr.rel (%p90) target = $region16
      $region15: #{tpu_custom_call.1} parent=5 // pred_region
        // Predicated region
        $region17: #{tpu_custom_call.1} parent=15 // pred_check
          %p93 = pneg %p42
        $region18: #{tpu_custom_call.1} parent=15 // pred_check_branch
          %95 = sbr.rel (%p93) target = $region20
        $region19: #{tpu_custom_call.1} parent=15 // pred_region
          %s96 = sand.u32 %s32, 1
          %s97 = scalar_lea.sflag [#allocation5], %s96
          %s98 = sand.u32 %s32, 1
          %s99 = smul.addr %s98, 8
          %s100 = scalar_lea.vmem [#allocation4], %s99
          %102 = vsyncadd %s97, 0
          %s103 = smul.addr %s22, 4
          %s104 = smul.addr %s103, 2
          %s105 = scalar_lea.hbm %s1, %s104
          %s106 = sshll.u32 %s105, 4
          %s107 = int_to_ptr.hbm [resolvable:$true] %s106
          %s108 = sshll.u32 %s100, 4
          %s109 = int_to_ptr.vmem [resolvable:$true] %s108
          %114 = dma.hbm_to_vmem [thread:$0]  %s107, 128, %s109, %s97, 32, 32, 2
        $region20: #{tpu_custom_call.1} parent=15 // pred_fallthru
          _
      $region16: #{tpu_custom_call.1} parent=5 // pred_fallthru
        _
      %p115 = scmp.le.s32.totalorder 1, %s22
      %p116 = scmp.lt.s32.totalorder %s22, 3
      %p117 = pnand %p115, %p116
      %p118 = pneg %p117
      // Predicated region
      $region21: #{tpu_custom_call.1} parent=5 // pred_check
        _
      $region22: #{tpu_custom_call.1} parent=5 // pred_check_branch
        %120 = sbr.rel (%p117) target = $region24
      $region23: #{tpu_custom_call.1} parent=5 // pred_region
        %s121 = ssub.s32 %s22, 1
        %s122 = sand.u32 %s35, 1
        %s123 = scalar_lea.sflag [#allocation5], %s122
        %s124 = sand.u32 %s35, 1
        %s125 = smul.addr %s124, 8
        %s126 = scalar_lea.vmem [#allocation4], %s125
        // Predicated region
        $region25: #{tpu_custom_call.1} parent=23 // pred_check
          %p127 = pneg %p48
        $region26: #{tpu_custom_call.1} parent=23 // pred_check_branch
          %129 = sbr.rel (%p127) target = $region28
        $region27: #{tpu_custom_call.1} parent=23 // pred_region
          %131 = dma.done %s123, 128
        $region28: #{tpu_custom_call.1} parent=23 // pred_fallthru
          _
        %s132 = sand.u32 %s35, 1
        %s133 = scalar_lea.sflag [#allocation5], %s132
        %s134 = sand.u32 %s35, 1
        %s135 = smul.addr %s134, 8
        %s136 = scalar_lea.vmem [#allocation4], %s135
        %p137 = pneg %p48
        %p138 = pneg %p45
        %p139 = pneg %p74
        %p140 = pneg %p71
        %s141 = sand.u32 %s61, 1
        %s142 = scalar_lea.sflag [#allocation6], %s141
        %s143 = sand.u32 %s61, 1
        %s144 = smul.addr %s143, 8
        %s145 = scalar_lea.vmem [#allocation7], %s144
        %s146 = sld [smem:[#allocation3]]
        %s147 = smul.u32 %s146, 2
        %s148 = scalar_lea.vmem %s126, %s147 [#allocation4]
        %v149 = vld [vmem:[%s148] sm:$0x3]
        %150 = vst [vmem:[%s145] sm:$0x3] %v149
        %s151 = sld [smem:[#allocation3 + $0x1]]
        %s152 = smul.u32 %s151, 2
        %s153 = scalar_lea.vmem %s126, %s152 [#allocation4]
        %v154 = vld [vmem:[%s153] sm:$0x3]
        %s155 = scalar_lea.vmem %s145, 2 [#allocation7]
        %156 = vst [vmem:[%s155] sm:$0x3] %v154
        %s157 = sld [smem:[#allocation3 + $0x2]]
        %s158 = smul.u32 %s157, 2
        %s159 = scalar_lea.vmem %s126, %s158 [#allocation4]
        %v160 = vld [vmem:[%s159] sm:$0x3]
        %s161 = scalar_lea.vmem %s145, 4 [#allocation7]
        %162 = vst [vmem:[%s161] sm:$0x3] %v160
        %s163 = sld [smem:[#allocation3 + $0x3]]
        %s164 = smul.u32 %s163, 2
        %s165 = scalar_lea.vmem %s126, %s164 [#allocation4]
        %v166 = vld [vmem:[%s165] sm:$0x3]
        %s167 = scalar_lea.vmem %s145, 6 [#allocation7]
        %168 = vst [vmem:[%s167] sm:$0x3] %v166
        %s169 = sand.u32 %s61, 1
        %s170 = scalar_lea.sflag [#allocation6], %s169
        %s171 = sand.u32 %s61, 1
        %s172 = smul.addr %s171, 8
        %s173 = scalar_lea.vmem [#allocation7], %s172
        // Predicated region
        $region29: #{tpu_custom_call.1} parent=23 // pred_check
          %p174 = pneg %p71
        $region30: #{tpu_custom_call.1} parent=23 // pred_check_branch
          %176 = sbr.rel (%p174) target = $region32
        $region31: #{tpu_custom_call.1} parent=23 // pred_region
          %178 = vsyncadd %s170, 0
          %s179 = smul.addr %s27, 4
          %s180 = smul.addr %s179, 2
          %s181 = scalar_lea.hbm %s2, %s180
          %s182 = sshll.u32 %s173, 4
          %s183 = int_to_ptr.vmem [resolvable:$true] %s182
          %s184 = sshll.u32 %s181, 4
          %s185 = int_to_ptr.hbm [resolvable:$true] %s184
          %190 = dma.vmem_to_hbm [thread:$0]  %s183, 128, %s185, %s170, 32, 32, 2
        $region32: #{tpu_custom_call.1} parent=23 // pred_fallthru
          _
      $region24: #{tpu_custom_call.1} parent=5 // pred_fallthru
        _
      %p191 = scmp.le.s32.totalorder 2, %s22
      // Predicated region
      $region33: #{tpu_custom_call.1} parent=5 // pred_check
        %p192 = pneg %p191
      $region34: #{tpu_custom_call.1} parent=5 // pred_check_branch
        %194 = sbr.rel (%p192) target = $region36
      $region35: #{tpu_custom_call.1} parent=5 // pred_region
        %s195 = ssub.s32 %s22, 2
        // Predicated region
        $region37: #{tpu_custom_call.1} parent=35 // pred_check
          %p196 = pneg %p77
        $region38: #{tpu_custom_call.1} parent=35 // pred_check_branch
          %198 = sbr.rel (%p196) target = $region40
        $region39: #{tpu_custom_call.1} parent=35 // pred_region
          %s199 = sand.u32 %s62, 1
          %s200 = scalar_lea.sflag [#allocation6], %s199
          %s201 = sand.u32 %s62, 1
          %s202 = smul.addr %s201, 8
          %s203 = scalar_lea.vmem [#allocation7], %s202
          %205 = dma.done %s200, 128
        $region40: #{tpu_custom_call.1} parent=35 // pred_fallthru
          _
      $region36: #{tpu_custom_call.1} parent=5 // pred_fallthru
        _
    $region6: #{tpu_custom_call.1} parent=1 // loop_footer
      %s26 = sadd.s32 1, %s22
    $region7: #{tpu_custom_call.1} parent=1 // loop_footer_branch
      %21 = sbr.rel target = $region3
    $region8: #{tpu_custom_call.1} parent=1 // loop_exit
      _
    %206 = vsyncpa [#allocation5], 1
    %s207 = scalar_lea.sflag [#allocation5], 1
    %208 = vsyncpa %s207, 1
    %209 = vsyncpa [#allocation6], 1
    %s210 = scalar_lea.sflag [#allocation6], 1
    %211 = vsyncpa %s210, 1

</llo_original>
